<compile_context>
chip_gen: v7x
topology: tpu7x:2x2x1
jax: 0.10.0
libtpu: 0.0.40
codegen_flags: <defaults>
</compile_context>

<pallas_src>
import functools

import numpy as np
import jax
import jax.numpy as jnp
from jax import lax
from jax.experimental import pallas as pl
from jax.experimental.pallas import tpu as pltpu


def _round_up(v, m):
    return ((v + m - 1) // m) * m


# --------------------------------------------------------------------------- #
# Chip-aware sizing
# --------------------------------------------------------------------------- #
def _chip_config():
    """Returns (block_bytes_budget, vmem_limit_ceiling_bytes, tensorcores_per_chip).

    v5e/v6e : 128 MiB VMEM, 1 TC          -> ~8 MiB blocks, allow up to 64 MiB scoped.
    v7x     : 64 MiB VMEM *per TC*, 2 TCs -> size per TC: ~6 MiB blocks, <=48 MiB.
    Unknown : fall back to the v7x-safe numbers (also fine for v4/v5p megacore).
    """
    kind = ""
    try:
        kind = jax.devices()[0].device_kind.lower()
    except Exception:
        pass
    if "v7" in kind:
        return 6 << 20, 48 << 20, 2
    if any(t in kind for t in ("v6", "v5e", "v5 lite", "v5lite")):
        return 8 << 20, 64 << 20, 1
    return 6 << 20, 48 << 20, 2


# --------------------------------------------------------------------------- #
# Kernels
# --------------------------------------------------------------------------- #
def _depthwise_taps_kernel(x_ref, o_ref, *, taps_by_col, H):
    """Generic (non-separable) path: valid 2-D correlation, taps as constants.

    x_ref : VMEM (Hp, L128) -- several (n, c) slabs folded side by side on the lane
                               axis; each slab occupies a contiguous Wp-wide strip.
    o_ref : VMEM (H,  L128) -- lane-dense output block.
    taps_by_col : tuple over j (filter column) of tuples of (i, value), value != 0,
                  baked as Python constants (no SMEM traffic, zero taps dropped).

    Lane-roll invariant: tap column j is fetched with a global lane roll of -j, which
    pulls columns of the NEIGHBOURING strip / lane padding into the last (kw - 1)
    columns of every strip.  This is only correct because the wrapper discards strip
    columns [W, Wp) (and Wp - W == kw - 1) and lanes [L, L128).
    """
    x = x_ref[...]
    L = x.shape[-1]
    nz_cols = [j for j in range(len(taps_by_col)) if taps_by_col[j]]
    acc = None
    xs = x
    for j in range(nz_cols[-1] + 1 if nz_cols else 0):
        if j > 0:
            # Incremental roll (XLU): bring column (c + j) to lane c; the previously
            # rolled copy (and, after j == 1, the original x) is dead, so at most
            # ~2 block-sized f32 temporaries stay live.
            xs = pltpu.roll(xs, L - 1, axis=1)
        for i, v in taps_by_col[j]:
            band = xs[i:i + H, :]
            if band.dtype != jnp.float32:
                band = band.astype(jnp.float32)        # per-band cast, not per-block
            term = band if v == 1.0 else v * band
            acc = term if acc is None else acc + term
    if acc is None:                                    # all-zero filter
        o_ref[...] = jnp.zeros_like(o_ref)
    else:
        o_ref[...] = acc.astype(o_ref.dtype)


def _depthwise_separable_kernel(x_ref, o_ref, *, u_taps, v_taps, H):
    """Rank-1 (separable) fast path: filter == outer(u, v).

    Vertical pass over sublane bands (kh taps) then horizontal pass via incremental
    lane rolls on the H-row intermediate (kw taps): 2*(kh + kw) VALU ops per output
    instead of 2*kh*kw, and the misaligned sublane-band realignment happens once
    instead of once per column tap.  Same lane-roll / discarded-border invariant as
    the generic kernel.
    """
    x = x_ref[...]
    L = x.shape[-1]

    # -- vertical pass (sublane bands), f32 accumulation
    t = None
    for i, u in enumerate(u_taps):
        if u == 0.0:
            continue
        band = x[i:i + H, :]
        if band.dtype != jnp.float32:
            band = band.astype(jnp.float32)
        term = band if u == 1.0 else u * band
        t = term if t is None else t + term
    nz = [j for j, v in enumerate(v_taps) if v != 0.0]
    if t is None or not nz:                            # all-zero filter
        o_ref[...] = jnp.zeros_like(o_ref)
        return

    # -- horizontal pass (lane rolls on the H-row intermediate)
    acc = None
    ts = t
    for j in range(nz[-1] + 1):
        if j > 0:
            ts = pltpu.roll(ts, L - 1, axis=1)
        v = v_taps[j]
        if v == 0.0:
            continue
        term = ts if v == 1.0 else v * ts
        acc = term if acc is None else acc + term
    o_ref[...] = acc.astype(o_ref.dtype)


# --------------------------------------------------------------------------- #
# Wrapper
# --------------------------------------------------------------------------- #
def _decompose_filter(filt):
    """Static (construction-time) analysis of the filter: nonzero taps grouped by
    column, plus a rank-1 (separable) decomposition when one exists."""
    f = np.asarray(filt, dtype=np.float64)
    assert f.ndim == 2, "filter must be 2-D"
    kh, kw = f.shape
    taps_by_col = tuple(
        tuple((i, float(f[i, j])) for i in range(kh) if f[i, j] != 0.0)
        for j in range(kw))
    u_taps = v_taps = None
    if f.size and np.any(f != 0.0):
        U, s, Vt = np.linalg.svd(f)
        if len(s) == 1 or s[1] <= 1e-7 * s[0]:
            u = U[:, 0] * s[0]
            v = Vt[0, :]
            if np.allclose(np.outer(u, v), f,
                           rtol=1e-6, atol=1e-9 * max(1.0, float(np.abs(f).max()))):
                u_taps = tuple(float(x) for x in u)
                v_taps = tuple(float(x) for x in v)
    return kh, kw, taps_by_col, u_taps, v_taps


def _depthwise_conv_impl(x_pre, *, kh, kw, taps_by_col, u_taps, v_taps):
    """Depthwise 'valid' conv of NCHW `x_pre` with one static 2-D filter replicated
    across all channels.  Intended to run under jax.jit (FilterLayer does this) so
    the fold / unfold layout plumbing fuses with the padding into one copy each way."""
    if not jnp.issubdtype(x_pre.dtype, jnp.floating):
        # Integer / bool inputs: compute and return in f32 (matches the float conv;
        # avoids silent truncation on the output store).
        x_pre = x_pre.astype(jnp.float32)

    N, C, Hp, Wp = x_pre.shape
    H, W = Hp - kh + 1, Wp - kw + 1
    assert H >= 1 and W >= 1, "filter larger than the (pre-filtered) input"
    # Invariant the kernels rely on: the last (kw - 1) columns of every strip are
    # roll-contaminated and must be discarded by the unfold below.
    assert Wp - W == kw - 1
    G = N * C
    itemsize = jnp.dtype(x_pre.dtype).itemsize

    block_budget, vmem_ceiling, num_tc = _chip_config()

    # -- slabs folded per block: bounded by the HBM-block budget AND by what actually
    #    fits in scoped VMEM (2x in + 2x out double buffers + ~3 live f32 temps).
    per_slab_in = Hp * Wp * itemsize
    per_slab_vmem = 2 * Hp * Wp * itemsize + 2 * H * Wp * itemsize + 3 * Hp * Wp * 4
    bg = max(1, block_budget // per_slab_in)
    bg = max(1, min(bg, (vmem_ceiling - (4 << 20)) // per_slab_vmem))
    bg = min(bg, G)
    nb = -(-G // bg)

    # -- megacore balance: the ("parallel",) grid axis is sharded across the chip's
    #    TensorCores (2 on v7x); keep the number of blocks a multiple of that count.
    if num_tc > 1 and G >= num_tc and nb % num_tc != 0:
        nb = -(-nb // num_tc) * num_tc
        bg = -(-G // nb)
    Gp = nb * bg

    L = bg * Wp                    # folded lane width (data)
    L128 = _round_up(L, 128)       # lane-dense width (multiple of 128)

    # -- fold: (N, C, Hp, Wp) -> (nb, Hp, L128).  Pure layout plumbing; under jit the
    #    pad + transpose fuse into a single copy pass.
    # TODO(synk): for very large tensors this is still one extra HBM pass each way;
    # it could be removed with an in-kernel per-slab DMA gather (memory_space=pl.ANY
    # + make_async_copy), at the cost of bg tiny DMAs per grid step.
    xs = x_pre.reshape(G, Hp, Wp)
    if Gp != G:
        xs = jnp.pad(xs, ((0, Gp - G), (0, 0), (0, 0)))
    xs = xs.reshape(nb, bg, Hp, Wp).transpose(0, 2, 1, 3).reshape(nb, Hp, L)
    if L128 != L:
        xs = jnp.pad(xs, ((0, 0), (0, 0), (0, L128 - L)))

    if u_taps is not None:
        kernel = functools.partial(_depthwise_separable_kernel,
                                   u_taps=u_taps, v_taps=v_taps, H=H)
    else:
        kernel = functools.partial(_depthwise_taps_kernel,
                                   taps_by_col=taps_by_col, H=H)

    # -- VMEM model: double-buffered in/out blocks + live f32 kernel temporaries.
    in_block = Hp * L128 * itemsize
    out_block = H * L128 * itemsize
    live_temps = 3 * Hp * L128 * 4
    vmem_limit = int(min(vmem_ceiling,
                         max(16 << 20,
                             2 * in_block + 2 * out_block + live_temps + (2 << 20))))

    out = pl.pallas_call(
        kernel,
        out_shape=jax.ShapeDtypeStruct((nb, H, L128), x_pre.dtype),
        grid_spec=pltpu.PrefetchScalarGridSpec(
            num_scalar_prefetch=0,
            grid=(nb,),
            in_specs=[pl.BlockSpec((pl.Squeezed(), Hp, L128), lambda b: (b, 0, 0))],
            out_specs=pl.BlockSpec((pl.Squeezed(), H, L128), lambda b: (b, 0, 0)),
        ),
        compiler_params=pltpu.CompilerParams(
            dimension_semantics=("parallel",),
            vmem_limit_bytes=vmem_limit),
    )(xs)

    # -- unfold: (nb, H, L128) -> (N, C, H, W).  Strip columns [W, Wp), lane padding
    #    [L, L128) and slab padding [G, Gp) carry roll contamination / garbage and
    #    are discarded here (this is what makes the in-kernel lane rolls legal).
    y = out[:, :, :L].reshape(nb, H, bg, Wp)[..., :W]
    y = y.transpose(0, 2, 1, 3).reshape(Gp, H, W)[:G]
    return y.reshape(N, C, H, W)


def depthwise_filter_conv(x_pre, filt):
    """Functional entry point.  `filt` must be a concrete host-side array: its taps
    are baked into the kernel as compile-time constants (they are a fixed,
    non-trainable parameter in the original module)."""
    kh, kw, taps_by_col, u_taps, v_taps = _decompose_filter(filt)
    return _depthwise_conv_impl(x_pre, kh=kh, kw=kw, taps_by_col=taps_by_col,
                                u_taps=u_taps, v_taps=v_taps)


class FilterLayer:
    """JAX/Pallas port of CEM.Filter_Layer."""

    def __init__(self, filt, pre_filter_func, post_filter_func=None, num_channels=3):
        kh, kw, taps_by_col, u_taps, v_taps = _decompose_filter(filt)
        self.filt = jnp.asarray(filt, jnp.float32)
        self.num_channels = num_channels
        # TODO(synk): pre_filter_func is an arbitrary user callable in CEM; when it is
        # known to be a replicate-pad it could be fused into the kernel via clamped
        # halo indexing to remove one HBM pass.
        self.pre_filter_func = pre_filter_func
        self.post_filter_func = (lambda x: x) if post_filter_func is None else post_filter_func
        # Taps are fixed (requires_grad=False in the PyTorch module), so they live in
        # the kernel closure; fold + kernel + unfold are jitted as one unit so the
        # layout passes fuse into a single copy each way.
        self._conv = jax.jit(functools.partial(
            _depthwise_conv_impl, kh=kh, kw=kw, taps_by_col=taps_by_col,
            u_taps=u_taps, v_taps=v_taps))

    def __call__(self, x):
        return self.post_filter_func(self._conv(self.pre_filter_func(x)))


# --------------------------------------------------------------------------- #
# Self-test
# --------------------------------------------------------------------------- #
if __name__ == "__main__":
    key = jax.random.PRNGKey(0)

    N, C, H, W = 2, 3, 16, 16
    x = jax.random.normal(key, (N, C, H, W), dtype=jnp.float32)

    def make_pre_filter(kh, kw):
        def pre_filter(z):
            ph, pw = kh // 2, kw // 2
            return jnp.pad(z, ((0, 0), (0, 0), (ph, ph), (pw, pw)), mode="edge")
        return pre_filter

    def reference(x_pre, filt, channels):
        f = jnp.asarray(filt, jnp.float32)
        w = jnp.tile(f[None, None, :, :], (channels, 1, 1, 1))   # (C_out, 1, kh, kw)
        return lax.conv_general_dilated(
            x_pre, w, window_strides=(1, 1), padding="VALID",
            dimension_numbers=("NCHW", "OIHW", "NCHW"), feature_group_count=channels)

    # 1) separable (rank-1) Gaussian -> exercises the separable fast path
    gauss = np.array([[1., 2., 1.],
                      [2., 4., 2.],
                      [1., 2., 1.]], dtype=np.float32) / 16.0
    pre = make_pre_filter(*gauss.shape)
    layer = FilterLayer(gauss, pre, post_filter_func=None, num_channels=C)
    out = jax.block_until_ready(layer(x))
    ref = reference(pre(x), gauss, C)
    assert out.shape == (N, C, H, W)
    assert jnp.allclose(out, ref, atol=1e-5, rtol=1e-5)

    # 2) non-separable Laplacian (rank 2, with zero taps) -> generic taps path
    lap = np.array([[0., 1., 0.],
                    [1., -4., 1.],
                    [0., 1., 0.]], dtype=np.float32)
    pre2 = make_pre_filter(*lap.shape)
    layer2 = FilterLayer(lap, pre2, post_filter_func=lambda y: y, num_channels=C)
    out2 = jax.block_until_ready(layer2(x))
    ref2 = reference(pre2(x), lap, C)
    assert jnp.allclose(out2, ref2, atol=1e-5, rtol=1e-5)

    # 3) bf16 I/O smoke test (f32 accumulation inside the kernel, bf16 in/out)
    x_bf = x.astype(jnp.bfloat16)
    out_bf = jax.block_until_ready(layer(x_bf))
    ref_bf = reference(pre(x_bf.astype(jnp.float32)), gauss, C)
    assert out_bf.dtype == jnp.bfloat16
    assert jnp.allclose(out_bf.astype(jnp.float32), ref_bf, atol=5e-2, rtol=5e-2)

    print("KERNEL_OK")
</pallas_src>

<mosaic_0001>
module attributes {stable_mosaic.version = 11 : i64} {
  func.func @_depthwise_separable_kernel(%arg0: i32, %arg1: memref<1x18x128xf32, #tpu.memory_space<vmem>>, %arg2: memref<1x16x128xf32, #tpu.memory_space<vmem>>) attributes {dimension_semantics = [#tpu.dimension_semantics<parallel>], iteration_bounds = array<i64: 2>, scalar_prefetch = 0 : i64, scratch_operands = 0 : i64, tpu.core_type = #tpu.core_type<tc>, window_params = [{transform_indices = @transform_0, window_bounds = array<i64: 1, 18, 128>}, {transform_indices = @transform_1, window_bounds = array<i64: 1, 16, 128>}]} {
    %c0 = arith.constant 0 : index
    %c0_0 = arith.constant 0 : index
    %c0_1 = arith.constant 0 : index
    %0 = vector.load %arg1[%c0, %c0_0, %c0_1] : memref<1x18x128xf32, #tpu.memory_space<vmem>>, vector<1x18x128xf32>
    %1 = vector.shape_cast %0 : vector<1x18x128xf32> to vector<18x128xf32>
    %2 = vector.extract_strided_slice %1 {offsets = [0, 0], sizes = [16, 128], strides = [1, 1]} : vector<18x128xf32> to vector<16x128xf32>
    %cst = arith.constant -0.153093114 : f32
    %3 = vector.broadcast %cst : f32 to vector<16x128xf32>
    %4 = arith.mulf %3, %2 : vector<16x128xf32>
    %5 = vector.extract_strided_slice %1 {offsets = [1, 0], sizes = [16, 128], strides = [1, 1]} : vector<18x128xf32> to vector<16x128xf32>
    %cst_2 = arith.constant -0.306186229 : f32
    %6 = vector.broadcast %cst_2 : f32 to vector<16x128xf32>
    %7 = arith.mulf %6, %5 : vector<16x128xf32>
    %8 = arith.addf %4, %7 : vector<16x128xf32>
    %9 = vector.extract_strided_slice %1 {offsets = [2, 0], sizes = [16, 128], strides = [1, 1]} : vector<18x128xf32> to vector<16x128xf32>
    %cst_3 = arith.constant -0.153093114 : f32
    %10 = vector.broadcast %cst_3 : f32 to vector<16x128xf32>
    %11 = arith.mulf %10, %9 : vector<16x128xf32>
    %12 = arith.addf %8, %11 : vector<16x128xf32>
    %cst_4 = arith.constant -0.408248305 : f32
    %13 = vector.broadcast %cst_4 : f32 to vector<16x128xf32>
    %14 = arith.mulf %13, %12 : vector<16x128xf32>
    %c127_i32 = arith.constant 127 : i32
    %15 = tpu.dynamic_rotate %12 by %c127_i32 dim 1 : vector<16x128xf32>, i32 -> vector<16x128xf32>
    %cst_5 = arith.constant -0.816496611 : f32
    %16 = vector.broadcast %cst_5 : f32 to vector<16x128xf32>
    %17 = arith.mulf %16, %15 : vector<16x128xf32>
    %18 = arith.addf %14, %17 : vector<16x128xf32>
    %c127_i32_6 = arith.constant 127 : i32
    %19 = tpu.dynamic_rotate %15 by %c127_i32_6 dim 1 : vector<16x128xf32>, i32 -> vector<16x128xf32>
    %cst_7 = arith.constant -0.408248305 : f32
    %20 = vector.broadcast %cst_7 : f32 to vector<16x128xf32>
    %21 = arith.mulf %20, %19 : vector<16x128xf32>
    %22 = arith.addf %18, %21 : vector<16x128xf32>
    %c0_8 = arith.constant 0 : index
    %c0_9 = arith.constant 0 : index
    %c0_10 = arith.constant 0 : index
    %23 = vector.load %arg2[%c0_8, %c0_9, %c0_10] : memref<1x16x128xf32, #tpu.memory_space<vmem>>, vector<1x16x128xf32>
    %24 = vector.shape_cast %23 : vector<1x16x128xf32> to vector<16x128xf32>
    %25 = vector.shape_cast %22 : vector<16x128xf32> to vector<1x16x128xf32>
    tpu.vector_store %arg2[%c0_8, %c0_9, %c0_10], %25 {strides = array<i32>} : memref<1x16x128xf32, #tpu.memory_space<vmem>>, vector<1x16x128xf32>,
    return
  }
  func.func @transform_0(%arg0: i32) -> (i32, i32, i32) {
    %c0_i32 = arith.constant 0 : i32
    %c0_i32_0 = arith.constant 0 : i32
    %c0_i32_1 = arith.constant 0 : i32
    return %arg0, %c0_i32, %c0_i32_0 : i32, i32, i32
  }
  func.func @transform_1(%arg0: i32) -> (i32, i32, i32) {
    %c0_i32 = arith.constant 0 : i32
    %c0_i32_0 = arith.constant 0 : i32
    %c0_i32_1 = arith.constant 0 : i32
    return %arg0, %c0_i32, %c0_i32_0 : i32, i32, i32
  }
}

</mosaic_0001>

<llo_original>
// kernel: _depthwise_conv_impl.1
$region0: #{_depthwise_conv_impl.1}
  #allocation0 [shape = 'u32[]', space=smem, size = 0x4, offset = 0x4, fixed_abs, tag = 'smem constant byte address 0x4 - core index']
  #allocation1 [shape = 'u32[144,128]{1,0:T(1,128)}', space=vmem, size = 0x12000, scoped, tag = 'internal scratch']
  %s0 = inlined_call_operand.vmem [shape: f32[2,18,128], index: 0, kind: input, shape index: {}]
  %s1 = inlined_call_operand.vmem [shape: f32[2,16,128], index: 1, kind: output, shape index: {}]
  %s2 = sld [smem:[#allocation0]]
  $region37: #{_depthwise_conv_impl.1} parent=0
    _
  %s4 = ssub.s32 1, %s2
  %s5 = scalar_select 0, %s4, %s2
  loop: start=0, step=1, limit=4
  $region2: #{_depthwise_conv_impl.1} parent=0 // loop_pre_header
    _
  $region3: #{_depthwise_conv_impl.1} parent=0 // loop_header
    %s7 = sphi 0, %s11
    %p8 = scmp.ge.s32.totalorder %s7, 4
    %s17 = sphi 0, %s19
    %s20 = sphi 0, %s17
    %s21 = sphi 0, %s20
    %s37 = sphi 0, %s21
    %s43 = sphi 0, %s45
    %s46 = sphi 0, %s43
    %s47 = sphi 0, %s46
    %s63 = sphi 0, %s47
  $region4: #{_depthwise_conv_impl.1} parent=0 // loop_header_branch
    %10 = sbr.rel (%p8) target = $region8
  $region5: #{_depthwise_conv_impl.1} parent=0 // loop_body
    %s12 = ssub.s32 %s7, 1
    %s13 = ssub.s32 %s7, 2
    %s14 = sadd.s32 %s7, 1
    %s15 = ssub.s32 %s7, %s14
    %p16 = scmp.eq.s32.totalorder %s15, 0
    %s18 = sadd.s32 %s17, 1
    %s19 = scalar_select %p16, %s17, %s18
    %p22 = pneg %p16
    %p23 = scmp.eq.s32.totalorder %s7, 1
    %p24 = por %p22, %p23
    %p25 = scmp.ne.s32.totalorder %s17, %s20
    %p26 = scmp.eq.s32.totalorder %s7, 0
    %p27 = por %p25, %p26
    %p28 = scmp.ne.s32.totalorder %s17, %s20
    %p29 = scmp.eq.s32.totalorder %s12, 1
    %p30 = por %p28, %p29
    %p31 = scmp.ne.s32.totalorder %s20, %s21
    %p32 = scmp.eq.s32.totalorder %s12, 0
    %p33 = por %p31, %p32
    %p34 = scmp.ne.s32.totalorder %s20, %s21
    %p35 = scmp.eq.s32.totalorder %s13, 1
    %p36 = por %p34, %p35
    %p38 = scmp.ne.s32.totalorder %s21, %s37
    %p39 = scmp.eq.s32.totalorder %s13, 0
    %p40 = por %p38, %p39
    %s41 = ssub.s32 %s7, %s14
    %p42 = scmp.eq.s32.totalorder %s41, 0
    %s44 = sadd.s32 %s43, 1
    %s45 = scalar_select %p42, %s43, %s44
    %p48 = pneg %p42
    %p49 = scmp.eq.s32.totalorder %s7, 1
    %p50 = por %p48, %p49
    %p51 = scmp.ne.s32.totalorder %s43, %s46
    %p52 = scmp.eq.s32.totalorder %s7, 0
    %p53 = por %p51, %p52
    %p54 = scmp.ne.s32.totalorder %s43, %s46
    %p55 = scmp.eq.s32.totalorder %s12, 1
    %p56 = por %p54, %p55
    %p57 = scmp.ne.s32.totalorder %s46, %s47
    %p58 = scmp.eq.s32.totalorder %s12, 0
    %p59 = por %p57, %p58
    %p60 = scmp.ne.s32.totalorder %s46, %s47
    %p61 = scmp.eq.s32.totalorder %s13, 1
    %p62 = por %p60, %p61
    %p64 = scmp.ne.s32.totalorder %s47, %s63
    %p65 = scmp.eq.s32.totalorder %s13, 0
    %p66 = por %p64, %p65
    %p67 = scmp.le.s32.totalorder 1, %s7
    %p68 = scmp.lt.s32.totalorder %s7, 3
    %p69 = pnand %p67, %p68
    %p70 = pneg %p69
    // Predicated region
    $region9: #{_depthwise_conv_impl.1} parent=5 // pred_check
      _
    $region10: #{_depthwise_conv_impl.1} parent=5 // pred_check_branch
      %72 = sbr.rel (%p69) target = $region12
    $region11: #{_depthwise_conv_impl.1} parent=5 // pred_region
      %s73 = ssub.s32 %s7, 1
    $region12: #{_depthwise_conv_impl.1} parent=5 // pred_fallthru
      _
    %p74 = scmp.lt.s32.totalorder %s7, 2
    // Predicated region
    $region13: #{_depthwise_conv_impl.1} parent=5 // pred_check
      %p75 = pneg %p74
    $region14: #{_depthwise_conv_impl.1} parent=5 // pred_check_branch
      %77 = sbr.rel (%p75) target = $region16
    $region15: #{_depthwise_conv_impl.1} parent=5 // pred_region
      // Predicated region
      $region17: #{_depthwise_conv_impl.1} parent=15 // pred_check
        %p78 = pneg %p27
      $region18: #{_depthwise_conv_impl.1} parent=15 // pred_check_branch
        %80 = sbr.rel (%p78) target = $region20
      $region19: #{_depthwise_conv_impl.1} parent=15 // pred_region
        %p81 = scmp.lt.s32.totalorder %s7, 1
        %s82 = scalar_select %p81, %s7, 1
        %s83 = smul.addr %s82, 3
        %s84 = smul.addr %s83, 8
        %s85 = scalar_lea.vmem %s0, %s84
      $region20: #{_depthwise_conv_impl.1} parent=15 // pred_fallthru
        _
    $region16: #{_depthwise_conv_impl.1} parent=5 // pred_fallthru
      _
    %p86 = scmp.le.s32.totalorder 1, %s7
    %p87 = scmp.lt.s32.totalorder %s7, 3
    %p88 = pnand %p86, %p87
    %p89 = pneg %p88
    // Predicated region
    $region21: #{_depthwise_conv_impl.1} parent=5 // pred_check
      _
    $region22: #{_depthwise_conv_impl.1} parent=5 // pred_check_branch
      %91 = sbr.rel (%p88) target = $region24
    $region23: #{_depthwise_conv_impl.1} parent=5 // pred_region
      %s92 = ssub.s32 %s7, 1
      %p93 = scmp.lt.s32.totalorder %s12, 1
      %s94 = scalar_select %p93, %s12, 1
      %s95 = smul.addr %s94, 3
      %s96 = smul.addr %s95, 8
      %s97 = scalar_lea.vmem %s0, %s96
      %p98 = pneg %p33
      %p99 = pneg %p30
      %p100 = pneg %p59
      %p101 = pneg %p56
      %p102 = scmp.lt.s32.totalorder %s12, 1
      %s103 = scalar_select %p102, %s12, 1
      %s104 = smul.addr %s103, 2
      %s105 = smul.addr %s104, 8
      %s106 = scalar_lea.vmem %s1, %s105
      %p107 = scmp.lt.s32.totalorder %s12, 1
      %s108 = scalar_select %p107, %s12, 1
      %s109 = smul.addr %s108, 3
      %s110 = smul.addr %s109, 8
      %s111 = scalar_lea.vmem %s0, %s110
      %p112 = scmp.lt.s32.totalorder %s12, 1
      %s113 = scalar_select %p112, %s12, 1
      %s114 = smul.addr %s113, 2
      %s115 = smul.addr %s114, 8
      %s116 = scalar_lea.vmem %s1, %s115
      %v117 = vld [vmem:[%s111] sm:$0xff]
      %v118 = vld [vmem:[%s111 + $0x8] sm:$0xff]
      %v119 = vld [vmem:[%s111 + $0x10] sm:$0x3]
      %v120 = vmul.f32 %v117, -0.15309311
      %v121 = vmul.f32 %v118, -0.15309311
      %v122 = vmul.f32 %v117, -0.30618623
      %v123 = vmul.f32 %v118, -0.30618623
      %v124 = vmul.f32 %v119, -0.30618623
      %vm128 = vcmask 1046528
      %v129 = vrot.slane %v122, 1
      %v130 = vrot.slane %v123, 1
      %v131 = vsel %vm128, %v129, %v130
      %v132 = vrot.slane %v124, 1
      %v133 = vsel %vm128, %v130, %v132
      %v136 = vadd.f32 %v120, %v131
      %v137 = vadd.f32 %v121, %v133
      %v138 = vmul.f32 %v119, -0.15309311
      %vm142 = vcmask 1045504
      %v143 = vrot.slane %v120, 2
      %v144 = vrot.slane %v121, 2
      %v145 = vsel %vm142, %v143, %v144
      %v146 = vrot.slane %v138, 2
      %v147 = vsel %vm142, %v144, %v146
      %v150 = vadd.f32 %v136, %v145
      %v151 = vadd.f32 %v137, %v147
      %v152 = vmul.f32 %v150, -0.4082483
      %v153 = vmul.f32 %v151, -0.4082483
      %154 = vrot.lane.b32.xlu0 %v150, 127
      %v155 = vpop.permute.xlu0 %154
      %156 = vrot.lane.b32.xlu0 %v151, 127
      %v157 = vpop.permute.xlu0 %156
      %v158 = vmul.f32 %v155, -0.8164966
      %v159 = vmul.f32 %v157, -0.8164966
      %v160 = vadd.f32 %v152, %v158
      %v161 = vadd.f32 %v153, %v159
      %162 = vrot.lane.b32.xlu0 %v155, 127
      %v163 = vpop.permute.xlu0 %162
      %164 = vrot.lane.b32.xlu0 %v157, 127
      %v165 = vpop.permute.xlu0 %164
      %v166 = vmul.f32 %v163, -0.4082483
      %v167 = vmul.f32 %v165, -0.4082483
      %v168 = vadd.f32 %v160, %v166
      %v169 = vadd.f32 %v161, %v167
      %170 = vst [vmem:[%s116] sm:$0xff] %v168
      %171 = vst [vmem:[%s116 + $0x8] sm:$0xff] %v169
      %p172 = scmp.lt.s32.totalorder %s12, 1
      %s173 = scalar_select %p172, %s12, 1
      %s174 = smul.addr %s173, 2
      %s175 = smul.addr %s174, 8
      %s176 = scalar_lea.vmem %s1, %s175
      // Predicated region
      $region25: #{_depthwise_conv_impl.1} parent=23 // pred_check
        %p177 = pneg %p56
      $region26: #{_depthwise_conv_impl.1} parent=23 // pred_check_branch
        %179 = sbr.rel (%p177) target = $region28
      $region27: #{_depthwise_conv_impl.1} parent=23 // pred_region
        _
      $region28: #{_depthwise_conv_impl.1} parent=23 // pred_fallthru
        _
    $region24: #{_depthwise_conv_impl.1} parent=5 // pred_fallthru
      _
    %p180 = scmp.le.s32.totalorder 2, %s7
    // Predicated region
    $region29: #{_depthwise_conv_impl.1} parent=5 // pred_check
      %p181 = pneg %p180
    $region30: #{_depthwise_conv_impl.1} parent=5 // pred_check_branch
      %183 = sbr.rel (%p181) target = $region32
    $region31: #{_depthwise_conv_impl.1} parent=5 // pred_region
      %s184 = ssub.s32 %s7, 2
      // Predicated region
      $region33: #{_depthwise_conv_impl.1} parent=31 // pred_check
        %p185 = pneg %p62
      $region34: #{_depthwise_conv_impl.1} parent=31 // pred_check_branch
        %187 = sbr.rel (%p185) target = $region36
      $region35: #{_depthwise_conv_impl.1} parent=31 // pred_region
        %p188 = scmp.lt.s32.totalorder %s13, 1
        %s189 = scalar_select %p188, %s13, 1
        %s190 = smul.addr %s189, 2
        %s191 = smul.addr %s190, 8
        %s192 = scalar_lea.vmem %s1, %s191
      $region36: #{_depthwise_conv_impl.1} parent=31 // pred_fallthru
        _
    $region32: #{_depthwise_conv_impl.1} parent=5 // pred_fallthru
      _
  $region6: #{_depthwise_conv_impl.1} parent=0 // loop_footer
    %s11 = sadd.s32 1, %s7
  $region7: #{_depthwise_conv_impl.1} parent=0 // loop_footer_branch
    %6 = sbr.rel target = $region3
  $region8: #{_depthwise_conv_impl.1} parent=0 // loop_exit
    _

</llo_original>
